<compile_context>
chip_gen: v5e
topology: v5e:2x2
jax: 0.10.0
libtpu: 0.0.40
codegen_flags: <defaults>
</compile_context>

<pallas_src>
import functools
import numpy as np
import jax
import jax.numpy as jnp
from jax import lax
from jax.experimental import pallas as pl
from jax.experimental.pallas import tpu as pltpu

LANES = 128          # pad the action dimension to a full vreg lane group
NEG_BIAS = -1e30     # bias of padded action columns (never wins the argmax)


def _round_up(x, m):
    return (x + m - 1) // m * m


def _choose_block(batch: int, block_b: int) -> int:
    """Batch tile size: big tiles amortize the per-grid-step overhead, but
    large single-tile batches are split in two so v7x's second TensorCore gets
    work; over-cap batches get balanced tiles to minimize padding."""
    b8 = _round_up(batch, 8)
    if b8 <= block_b:
        if b8 >= 512:                      # worth splitting across 2 TCs
            return _round_up((b8 + 1) // 2, 8)
        return b8
    nblk = -(-b8 // block_b)               # tiles needed at the cap
    return _round_up(-(-b8 // nblk), 8)    # balance tiles, minimize padding


def _srl(x, k):
    # Logical right shift for int32: arithmetic shift + mask of the sign fill.
    return (x >> k) & jnp.int32((1 << (32 - k)) - 1)


def _mix32(x):
    # lowbias32-style integer hash. int32 multiplies wrap mod 2^32 in XLA, so
    # this lowers on Mosaic and on the CPU interpreter (no pltpu.prng_*).
    x = x ^ _srl(x, 16)
    x = x * jnp.int32(0x7FEB352D)
    x = x ^ _srl(x, 15)
    x = x * jnp.int32(-2073068917)         # 0x846CA68B as int32
    x = x ^ _srl(x, 16)
    return x


def _make_ddqn_kernel(dim_action: int, with_q: bool):
    def kernel(seed_ref, eps_ref, s_ref, w1_ref, b1_ref, w2_ref, b2_ref,
               w3_ref, b3_ref, *out_refs):
        if with_q:
            q_ref, greedy_ref, act_ref = out_refs
        else:
            (act_ref,) = out_refs

        # ---- QNet MLP: bf16 MXU operands (cast in-kernel), f32 accumulate ----
        x = s_ref[...].astype(jnp.bfloat16)                     # (bm, D)
        h1 = jnp.dot(x, w1_ref[...], preferred_element_type=jnp.float32)
        h1 = jnp.maximum(h1 + b1_ref[...], 0.0)
        h2 = jnp.dot(h1.astype(jnp.bfloat16), w2_ref[...],
                     preferred_element_type=jnp.float32)
        h2 = jnp.maximum(h2 + b2_ref[...], 0.0)
        q = jnp.dot(h2.astype(jnp.bfloat16), w3_ref[...],
                    preferred_element_type=jnp.float32) + b3_ref[...]
        bm = q.shape[0]

        if with_q:
            q_ref[...] = q                                       # (bm, 128) lane-dense

        # ---- greedy action, computed lane-dense along the batch axis ----
        # One transpose puts per-row results along lanes, so greedy/act are
        # stored as (1, bm) rows (4 B/row) instead of (bm, 128) slabs.
        qt = q.T                                                 # (128, bm)
        max_q = jnp.max(qt, axis=0, keepdims=True)               # (1, bm)
        a_idx = lax.broadcasted_iota(jnp.int32, qt.shape, 0)     # action index
        cand = jnp.where(qt == max_q, a_idx, jnp.int32(LANES))
        greedy = jnp.min(cand, axis=0, keepdims=True)            # first max (1, bm)
        greedy = jnp.minimum(greedy, dim_action - 1)             # safety clamp
        if with_q:
            greedy_ref[...] = greedy.reshape(1, 1, bm)

        # ---- epsilon-greedy on device: per-row hash PRNG, no cross-lane work ----
        rows = pl.program_id(0) * bm + lax.broadcasted_iota(jnp.int32, (1, bm), 1)
        bits = _mix32(rows * jnp.int32(-1640531535) + seed_ref[0])
        u_branch = _srl(bits, 8).astype(jnp.float32) * np.float32(1.0 / (1 << 24))
        bits2 = _mix32(bits ^ jnp.int32(0x632BE5AB))
        u_act = _srl(bits2, 8).astype(jnp.float32) * np.float32(1.0 / (1 << 24))
        rand_act = jnp.minimum((u_act * dim_action).astype(jnp.int32),
                               dim_action - 1)
        # Module semantics: np.random.rand() <= epsilon -> greedy, else random.
        sel = jnp.where(u_branch <= eps_ref[0], greedy, rand_act)
        act_ref[...] = sel.reshape(1, 1, bm)

    return kernel


@functools.partial(jax.jit, static_argnames=("dim_action", "block_b", "with_q"))
def _ddqn_pallas(state, prepared, seed, epsilon, *, dim_action, block_b, with_q):
    w1, b1, w2, b2, w3p, b3p = prepared
    B, D = state.shape
    bm = _choose_block(B, block_b)
    B_pad = _round_up(B, bm)
    nblk = B_pad // bm
    if B_pad != B:
        state = jnp.pad(state, ((0, B_pad - B), (0, 0)))   # f32; bf16 cast in-kernel

    row_spec = pl.BlockSpec((bm, D), lambda i: (i, 0))
    # Constant index maps keep weights/biases VMEM-resident across the grid.
    # (pipeline_mode=pl.Buffered(1) would halve their VMEM reservation if the
    #  hidden size is ever scaled up; negligible at H=32, so omitted.)
    rep_spec = lambda s: pl.BlockSpec(s, lambda i: (0, 0))
    smem_spec = pl.BlockSpec(memory_space=pltpu.MemorySpace.SMEM)
    scal_out = pl.BlockSpec((1, 1, bm), lambda i: (i, 0, 0))

    if with_q:
        out_shape = (jax.ShapeDtypeStruct((B_pad, LANES), jnp.float32),
                     jax.ShapeDtypeStruct((nblk, 1, bm), jnp.int32),
                     jax.ShapeDtypeStruct((nblk, 1, bm), jnp.int32))
        out_specs = [pl.BlockSpec((bm, LANES), lambda i: (i, 0)),
                     scal_out, scal_out]
    else:
        out_shape = (jax.ShapeDtypeStruct((nblk, 1, bm), jnp.int32),)
        out_specs = [scal_out]

    outs = pl.pallas_call(
        _make_ddqn_kernel(dim_action, with_q),
        out_shape=out_shape,
        grid_spec=pltpu.PrefetchScalarGridSpec(
            num_scalar_prefetch=0,
            grid=(nblk,),
            in_specs=[smem_spec, smem_spec, row_spec,
                      rep_spec(w1.shape), rep_spec(b1.shape),
                      rep_spec(w2.shape), rep_spec(b2.shape),
                      rep_spec(w3p.shape), rep_spec(b3p.shape)],
            out_specs=out_specs),
        compiler_params=pltpu.CompilerParams(
            dimension_semantics=("parallel",)),
    )(seed, epsilon, state, w1, b1, w2, b2, w3p, b3p)

    if with_q:
        q_pad, greedy, act = outs
        return (q_pad[:B, :dim_action],
                greedy.reshape(B_pad)[:B],
                act.reshape(B_pad)[:B])
    (act,) = outs
    return act.reshape(B_pad)[:B]


def ddqn_policy(state, prepared, seed, epsilon, *, dim_action, block_b=512):
    """QNet forward + greedy argmax + epsilon-greedy (Q values also returned).

    Returns (q_values [B, dim_action] f32, greedy_action [B] i32,
             selected_action [B] i32)."""
    return _ddqn_pallas(state, prepared, seed, epsilon, dim_action=dim_action,
                        block_b=block_b, with_q=True)


def ddqn_forward(state, prepared, dim_action, epsilon, *, seed=0,
                 eval_tag=True, block_b=512):
    """Mirrors DDQN.forward: returns only selected action(s). Uses the q-less
    kernel variant so Q values are never written to HBM on this path.

    # TODO(synk): the PyTorch module draws the epsilon branch / random action
    # from host-side np.random and returns a Python int via .item(); here it's
    # an on-device hash PRNG and a device array.  The caller must advance
    # `seed` every environment step or the exploration branch repeats.
    """
    eps_eff = float(epsilon) if eval_tag else 2.0     # eps > 1 => always greedy
    return _ddqn_pallas(state, prepared,
                        jnp.asarray([seed], jnp.int32),
                        jnp.asarray([eps_eff], jnp.float32),
                        dim_action=dim_action, block_b=block_b, with_q=False)


def init_qnet_params(key, dim_state, hidden, dim_action):
    """Deterministic synthetic QNet parameters (Glorot-ish uniform)."""
    ks = jax.random.split(key, 6)

    def lin(kw, kb, fan_in, fan_out):
        bound = 1.0 / np.sqrt(fan_in)
        w = jax.random.uniform(kw, (fan_in, fan_out), jnp.float32, -bound, bound)
        b = jax.random.uniform(kb, (1, fan_out), jnp.float32, -bound, bound)
        return w, b

    w1, b1 = lin(ks[0], ks[1], dim_state, hidden)
    w2, b2 = lin(ks[2], ks[3], hidden, hidden)
    w3, b3 = lin(ks[4], ks[5], hidden, dim_action)
    return (w1, b1, w2, b2, w3, b3)


def prepare_qnet_params(params, dim_action, lanes=LANES):
    """Pad output layer to 128 lanes (lane-dense) and cast MXU operands to bf16."""
    w1, b1, w2, b2, w3, b3 = params
    pad = lanes - dim_action
    w3p = jnp.pad(w3, ((0, 0), (0, pad)))                            # zero weights
    b3p = jnp.pad(b3, ((0, 0), (0, pad)), constant_values=NEG_BIAS)  # never argmax
    return (w1.astype(jnp.bfloat16), b1.astype(jnp.float32),
            w2.astype(jnp.bfloat16), b2.astype(jnp.float32),
            w3p.astype(jnp.bfloat16), b3p.astype(jnp.float32))


def qnet_reference(state, prepared, dim_action):
    """Plain-JAX reference with identical bf16-operand / f32-accumulate math."""
    w1, b1, w2, b2, w3p, b3p = prepared
    x = state.astype(jnp.bfloat16)
    h1 = jnp.maximum(jnp.dot(x, w1, preferred_element_type=jnp.float32) + b1, 0.0)
    h2 = jnp.maximum(jnp.dot(h1.astype(jnp.bfloat16), w2,
                             preferred_element_type=jnp.float32) + b2, 0.0)
    q = jnp.dot(h2.astype(jnp.bfloat16), w3p,
                preferred_element_type=jnp.float32) + b3p
    return q[:, :dim_action]


if __name__ == "__main__":
    # Small shapes consistent with the module: batch=2 states of dim 32,
    # hidden=32, dim_action=8.
    B, DIM_STATE, HIDDEN, DIM_ACTION = 2, 32, 32, 8

    key = jax.random.PRNGKey(0)
    k_state, k_params, k_big = jax.random.split(key, 3)

    state = jax.random.normal(k_state, (B, DIM_STATE), jnp.float32)
    raw_params = init_qnet_params(k_params, DIM_STATE, HIDDEN, DIM_ACTION)
    prepared = prepare_qnet_params(raw_params, DIM_ACTION)

    seed = jnp.asarray([0], jnp.int32)
    force_greedy = jnp.asarray([2.0], jnp.float32)   # u<=2 always -> greedy branch

    q_vals, greedy, act = ddqn_policy(state, prepared, seed, force_greedy,
                                      dim_action=DIM_ACTION)
    q_vals, greedy, act = jax.block_until_ready((q_vals, greedy, act))

    # Q-values match a plain-JAX reference with the same bf16/f32 math.
    q_ref = qnet_reference(state, prepared, DIM_ACTION)
    assert np.allclose(np.asarray(q_vals), np.asarray(q_ref), atol=1e-2, rtol=1e-2)
    # In-kernel argmax is consistent with the kernel's own Q-values, and the
    # forced-greedy epsilon branch returns the greedy action.
    assert np.array_equal(np.asarray(greedy),
                          np.argmax(np.asarray(q_vals), axis=1))
    assert np.array_equal(np.asarray(act), np.asarray(greedy))

    # Action-only path (no q HBM writeback) with a real epsilon: valid indices.
    act_eps = ddqn_forward(state, prepared, DIM_ACTION, epsilon=0.5, seed=7)
    act_eps = np.asarray(jax.block_until_ready(act_eps))
    assert act_eps.shape == (B,)
    assert np.all((act_eps >= 0) & (act_eps < DIM_ACTION))

    # eval_tag=False -> pure greedy, must match the in-kernel argmax.
    act_greedy = ddqn_forward(state, prepared, DIM_ACTION, epsilon=0.5,
                              seed=3, eval_tag=False)
    act_greedy = np.asarray(jax.block_until_ready(act_greedy))
    assert np.array_equal(act_greedy, np.asarray(greedy))

    # Larger batch exercises the multi-block grid, balanced tiling and padding.
    big_state = jax.random.normal(k_big, (600, DIM_STATE), jnp.float32)
    q_big, greedy_big, _ = ddqn_policy(big_state, prepared, seed, force_greedy,
                                       dim_action=DIM_ACTION)
    q_big, greedy_big = jax.block_until_ready((q_big, greedy_big))
    q_big_ref = qnet_reference(big_state, prepared, DIM_ACTION)
    assert np.allclose(np.asarray(q_big), np.asarray(q_big_ref),
                       atol=1e-2, rtol=1e-2)
    assert np.array_equal(np.asarray(greedy_big),
                          np.argmax(np.asarray(q_big), axis=1))

    print("KERNEL_OK")
</pallas_src>

<mosaic_0001>
module attributes {stable_mosaic.version = 11 : i64} {
  func.func @kernel(%arg0: i32, %arg1: memref<1xi32, #tpu.memory_space<smem>>, %arg2: memref<1xf32, #tpu.memory_space<smem>>, %arg3: memref<8x32xf32, #tpu.memory_space<vmem>>, %arg4: memref<32x32xbf16, #tpu.memory_space<vmem>>, %arg5: memref<1x32xf32, #tpu.memory_space<vmem>>, %arg6: memref<32x32xbf16, #tpu.memory_space<vmem>>, %arg7: memref<1x32xf32, #tpu.memory_space<vmem>>, %arg8: memref<32x128xbf16, #tpu.memory_space<vmem>>, %arg9: memref<1x128xf32, #tpu.memory_space<vmem>>, %arg10: memref<8x128xf32, #tpu.memory_space<vmem>>, %arg11: memref<1x1x8xi32, #tpu.memory_space<vmem>>, %arg12: memref<1x1x8xi32, #tpu.memory_space<vmem>>) attributes {dimension_semantics = [#tpu.dimension_semantics<parallel>], iteration_bounds = array<i64: 1>, scalar_prefetch = 0 : i64, scratch_operands = 0 : i64, tpu.core_type = #tpu.core_type<tc>, window_params = [{transform_indices = @transform_0, window_bounds = array<i64: 1>}, {transform_indices = @transform_1, window_bounds = array<i64: 1>}, {transform_indices = @transform_2, window_bounds = array<i64: 8, 32>}, {pipeline_mode = #tpu.pipeline_mode<synchronous>, transform_indices = @transform_3, window_bounds = array<i64: 32, 32>}, {pipeline_mode = #tpu.pipeline_mode<synchronous>, transform_indices = @transform_4, window_bounds = array<i64: 1, 32>}, {pipeline_mode = #tpu.pipeline_mode<synchronous>, transform_indices = @transform_5, window_bounds = array<i64: 32, 32>}, {pipeline_mode = #tpu.pipeline_mode<synchronous>, transform_indices = @transform_6, window_bounds = array<i64: 1, 32>}, {pipeline_mode = #tpu.pipeline_mode<synchronous>, transform_indices = @transform_7, window_bounds = array<i64: 32, 128>}, {pipeline_mode = #tpu.pipeline_mode<synchronous>, transform_indices = @transform_8, window_bounds = array<i64: 1, 128>}, {transform_indices = @transform_9, window_bounds = array<i64: 8, 128>}, {transform_indices = @transform_10, window_bounds = array<i64: 1, 1, 8>}, {transform_indices = @transform_11, window_bounds = array<i64: 1, 1, 8>}]} {
    %c0 = arith.constant 0 : index
    %c0_0 = arith.constant 0 : index
    %0 = vector.load %arg3[%c0, %c0_0] : memref<8x32xf32, #tpu.memory_space<vmem>>, vector<8x32xf32>
    %1 = arith.truncf %0 : vector<8x32xf32> to vector<8x32xbf16>
    %c0_1 = arith.constant 0 : index
    %c0_2 = arith.constant 0 : index
    %2 = vector.load %arg4[%c0_1, %c0_2] : memref<32x32xbf16, #tpu.memory_space<vmem>>, vector<32x32xbf16>
    %cst = arith.constant dense<0.000000e+00> : vector<8x32xf32>
    %3 = tpu.matmul %1, %2, %cst {dimension_numbers = #tpu.dot_dimension_numbers<[1], [0], [0], [1], [0, 0, 1, 1], [], []>} : vector<8x32xbf16>, vector<32x32xbf16>, vector<8x32xf32> -> vector<8x32xf32>
    %c0_3 = arith.constant 0 : index
    %c0_4 = arith.constant 0 : index
    %4 = vector.load %arg5[%c0_3, %c0_4] : memref<1x32xf32, #tpu.memory_space<vmem>>, vector<1x32xf32>
    %5 = vector.broadcast %4 : vector<1x32xf32> to vector<8x32xf32>
    %6 = arith.addf %3, %5 : vector<8x32xf32>
    %cst_5 = arith.constant 0.000000e+00 : f32
    %7 = vector.broadcast %cst_5 : f32 to vector<8x32xf32>
    %8 = arith.maximumf %6, %7 : vector<8x32xf32>
    %9 = arith.truncf %8 : vector<8x32xf32> to vector<8x32xbf16>
    %c0_6 = arith.constant 0 : index
    %c0_7 = arith.constant 0 : index
    %10 = vector.load %arg6[%c0_6, %c0_7] : memref<32x32xbf16, #tpu.memory_space<vmem>>, vector<32x32xbf16>
    %cst_8 = arith.constant dense<0.000000e+00> : vector<8x32xf32>
    %11 = tpu.matmul %9, %10, %cst_8 {dimension_numbers = #tpu.dot_dimension_numbers<[1], [0], [0], [1], [0, 0, 1, 1], [], []>} : vector<8x32xbf16>, vector<32x32xbf16>, vector<8x32xf32> -> vector<8x32xf32>
    %c0_9 = arith.constant 0 : index
    %c0_10 = arith.constant 0 : index
    %12 = vector.load %arg7[%c0_9, %c0_10] : memref<1x32xf32, #tpu.memory_space<vmem>>, vector<1x32xf32>
    %13 = vector.broadcast %12 : vector<1x32xf32> to vector<8x32xf32>
    %14 = arith.addf %11, %13 : vector<8x32xf32>
    %cst_11 = arith.constant 0.000000e+00 : f32
    %15 = vector.broadcast %cst_11 : f32 to vector<8x32xf32>
    %16 = arith.maximumf %14, %15 : vector<8x32xf32>
    %17 = arith.truncf %16 : vector<8x32xf32> to vector<8x32xbf16>
    %c0_12 = arith.constant 0 : index
    %c0_13 = arith.constant 0 : index
    %18 = vector.load %arg8[%c0_12, %c0_13] : memref<32x128xbf16, #tpu.memory_space<vmem>>, vector<32x128xbf16>
    %cst_14 = arith.constant dense<0.000000e+00> : vector<8x128xf32>
    %19 = tpu.matmul %17, %18, %cst_14 {dimension_numbers = #tpu.dot_dimension_numbers<[1], [0], [0], [1], [0, 0, 1, 1], [], []>} : vector<8x32xbf16>, vector<32x128xbf16>, vector<8x128xf32> -> vector<8x128xf32>
    %c0_15 = arith.constant 0 : index
    %c0_16 = arith.constant 0 : index
    %20 = vector.load %arg9[%c0_15, %c0_16] : memref<1x128xf32, #tpu.memory_space<vmem>>, vector<1x128xf32>
    %21 = vector.broadcast %20 : vector<1x128xf32> to vector<8x128xf32>
    %22 = arith.addf %19, %21 : vector<8x128xf32>
    %c0_17 = arith.constant 0 : index
    %c0_18 = arith.constant 0 : index
    %23 = vector.load %arg10[%c0_17, %c0_18] : memref<8x128xf32, #tpu.memory_space<vmem>>, vector<8x128xf32>
    tpu.vector_store %arg10[%c0_17, %c0_18], %22 {strides = array<i32>} : memref<8x128xf32, #tpu.memory_space<vmem>>, vector<8x128xf32>,
    %24 = tpu.transpose %22, [1, 0] : vector<8x128xf32> -> vector<128x8xf32>
    %cst_19 = arith.constant dense<0xFF800000> : vector<8xf32>
    %25 = vector.multi_reduction <maximumf>, %24, %cst_19 [0] : vector<128x8xf32> to vector<8xf32>
    %26 = vector.shape_cast %25 : vector<8xf32> to vector<1x8xf32>
    %27 = tpu.iota {dimensions = array<i32: 0>} : vector<128x8xi32>
    %28 = vector.broadcast %26 : vector<1x8xf32> to vector<128x8xf32>
    %29 = arith.cmpf oeq, %24, %28 : vector<128x8xf32>
    %c128_i32 = arith.constant 128 : i32
    %30 = vector.broadcast %c128_i32 : i32 to vector<128x8xi32>
    %31 = arith.select %29, %27, %30 : vector<128x8xi1>, vector<128x8xi32>
    %cst_20 = arith.constant dense<2147483647> : vector<8xi32>
    %32 = vector.multi_reduction <minsi>, %31, %cst_20 [0] : vector<128x8xi32> to vector<8xi32>
    %33 = vector.shape_cast %32 : vector<8xi32> to vector<1x8xi32>
    %c7_i32 = arith.constant 7 : i32
    %34 = vector.broadcast %c7_i32 : i32 to vector<1x8xi32>
    %35 = arith.minsi %33, %34 : vector<1x8xi32>
    %36 = vector.shape_cast %35 : vector<1x8xi32> to vector<1x1x8xi32>
    %c0_21 = arith.constant 0 : index
    %c0_22 = arith.constant 0 : index
    %c0_23 = arith.constant 0 : index
    %37 = vector.load %arg11[%c0_21, %c0_22, %c0_23] : memref<1x1x8xi32, #tpu.memory_space<vmem>>, vector<1x1x8xi32>
    tpu.vector_store %arg11[%c0_21, %c0_22, %c0_23], %36 {strides = array<i32>} : memref<1x1x8xi32, #tpu.memory_space<vmem>>, vector<1x1x8xi32>,
    %c8_i32 = arith.constant 8 : i32
    %38 = arith.muli %arg0, %c8_i32 : i32
    %39 = tpu.iota {dimensions = array<i32: 1>} : vector<1x8xi32>
    %40 = vector.broadcast %38 : i32 to vector<1x8xi32>
    %41 = arith.addi %40, %39 : vector<1x8xi32>
    %c-1640531535_i32 = arith.constant -1640531535 : i32
    %42 = vector.broadcast %c-1640531535_i32 : i32 to vector<1x8xi32>
    %43 = arith.muli %41, %42 : vector<1x8xi32>
    %c0_24 = arith.constant 0 : index
    %44 = memref.load %arg1[%c0_24] : memref<1xi32, #tpu.memory_space<smem>>
    %45 = vector.broadcast %44 : i32 to vector<1x8xi32>
    %46 = arith.addi %43, %45 : vector<1x8xi32>
    %c16_i32 = arith.constant 16 : i32
    %47 = vector.broadcast %c16_i32 : i32 to vector<1x8xi32>
    %48 = arith.shrsi %46, %47 : vector<1x8xi32>
    %c65535_i32 = arith.constant 65535 : i32
    %49 = vector.broadcast %c65535_i32 : i32 to vector<1x8xi32>
    %50 = arith.andi %48, %49 : vector<1x8xi32>
    %51 = arith.xori %46, %50 : vector<1x8xi32>
    %c2146121005_i32 = arith.constant 2146121005 : i32
    %52 = vector.broadcast %c2146121005_i32 : i32 to vector<1x8xi32>
    %53 = arith.muli %51, %52 : vector<1x8xi32>
    %c15_i32 = arith.constant 15 : i32
    %54 = vector.broadcast %c15_i32 : i32 to vector<1x8xi32>
    %55 = arith.shrsi %53, %54 : vector<1x8xi32>
    %c131071_i32 = arith.constant 131071 : i32
    %56 = vector.broadcast %c131071_i32 : i32 to vector<1x8xi32>
    %57 = arith.andi %55, %56 : vector<1x8xi32>
    %58 = arith.xori %53, %57 : vector<1x8xi32>
    %c-2073068917_i32 = arith.constant -2073068917 : i32
    %59 = vector.broadcast %c-2073068917_i32 : i32 to vector<1x8xi32>
    %60 = arith.muli %58, %59 : vector<1x8xi32>
    %c16_i32_25 = arith.constant 16 : i32
    %61 = vector.broadcast %c16_i32_25 : i32 to vector<1x8xi32>
    %62 = arith.shrsi %60, %61 : vector<1x8xi32>
    %c65535_i32_26 = arith.constant 65535 : i32
    %63 = vector.broadcast %c65535_i32_26 : i32 to vector<1x8xi32>
    %64 = arith.andi %62, %63 : vector<1x8xi32>
    %65 = arith.xori %60, %64 : vector<1x8xi32>
    %c8_i32_27 = arith.constant 8 : i32
    %66 = vector.broadcast %c8_i32_27 : i32 to vector<1x8xi32>
    %67 = arith.shrsi %65, %66 : vector<1x8xi32>
    %c16777215_i32 = arith.constant 16777215 : i32
    %68 = vector.broadcast %c16777215_i32 : i32 to vector<1x8xi32>
    %69 = arith.andi %67, %68 : vector<1x8xi32>
    %70 = arith.sitofp %69 : vector<1x8xi32> to vector<1x8xf32>
    %cst_28 = arith.constant 5.96046448E-8 : f32
    %71 = vector.broadcast %cst_28 : f32 to vector<1x8xf32>
    %72 = arith.mulf %70, %71 : vector<1x8xf32>
    %c1663821227_i32 = arith.constant 1663821227 : i32
    %73 = vector.broadcast %c1663821227_i32 : i32 to vector<1x8xi32>
    %74 = arith.xori %65, %73 : vector<1x8xi32>
    %c16_i32_29 = arith.constant 16 : i32
    %75 = vector.broadcast %c16_i32_29 : i32 to vector<1x8xi32>
    %76 = arith.shrsi %74, %75 : vector<1x8xi32>
    %c65535_i32_30 = arith.constant 65535 : i32
    %77 = vector.broadcast %c65535_i32_30 : i32 to vector<1x8xi32>
    %78 = arith.andi %76, %77 : vector<1x8xi32>
    %79 = arith.xori %74, %78 : vector<1x8xi32>
    %c2146121005_i32_31 = arith.constant 2146121005 : i32
    %80 = vector.broadcast %c2146121005_i32_31 : i32 to vector<1x8xi32>
    %81 = arith.muli %79, %80 : vector<1x8xi32>
    %c15_i32_32 = arith.constant 15 : i32
    %82 = vector.broadcast %c15_i32_32 : i32 to vector<1x8xi32>
    %83 = arith.shrsi %81, %82 : vector<1x8xi32>
    %c131071_i32_33 = arith.constant 131071 : i32
    %84 = vector.broadcast %c131071_i32_33 : i32 to vector<1x8xi32>
    %85 = arith.andi %83, %84 : vector<1x8xi32>
    %86 = arith.xori %81, %85 : vector<1x8xi32>
    %c-2073068917_i32_34 = arith.constant -2073068917 : i32
    %87 = vector.broadcast %c-2073068917_i32_34 : i32 to vector<1x8xi32>
    %88 = arith.muli %86, %87 : vector<1x8xi32>
    %c16_i32_35 = arith.constant 16 : i32
    %89 = vector.broadcast %c16_i32_35 : i32 to vector<1x8xi32>
    %90 = arith.shrsi %88, %89 : vector<1x8xi32>
    %c65535_i32_36 = arith.constant 65535 : i32
    %91 = vector.broadcast %c65535_i32_36 : i32 to vector<1x8xi32>
    %92 = arith.andi %90, %91 : vector<1x8xi32>
    %93 = arith.xori %88, %92 : vector<1x8xi32>
    %c8_i32_37 = arith.constant 8 : i32
    %94 = vector.broadcast %c8_i32_37 : i32 to vector<1x8xi32>
    %95 = arith.shrsi %93, %94 : vector<1x8xi32>
    %c16777215_i32_38 = arith.constant 16777215 : i32
    %96 = vector.broadcast %c16777215_i32_38 : i32 to vector<1x8xi32>
    %97 = arith.andi %95, %96 : vector<1x8xi32>
    %98 = arith.sitofp %97 : vector<1x8xi32> to vector<1x8xf32>
    %cst_39 = arith.constant 5.96046448E-8 : f32
    %99 = vector.broadcast %cst_39 : f32 to vector<1x8xf32>
    %100 = arith.mulf %98, %99 : vector<1x8xf32>
    %cst_40 = arith.constant 8.000000e+00 : f32
    %101 = vector.broadcast %cst_40 : f32 to vector<1x8xf32>
    %102 = arith.mulf %100, %101 : vector<1x8xf32>
    %103 = arith.fptosi %102 : vector<1x8xf32> to vector<1x8xi32>
    %c7_i32_41 = arith.constant 7 : i32
    %104 = vector.broadcast %c7_i32_41 : i32 to vector<1x8xi32>
    %105 = arith.minsi %103, %104 : vector<1x8xi32>
    %c0_42 = arith.constant 0 : index
    %106 = memref.load %arg2[%c0_42] : memref<1xf32, #tpu.memory_space<smem>>
    %107 = vector.broadcast %106 : f32 to vector<1x8xf32>
    %108 = arith.cmpf ole, %72, %107 : vector<1x8xf32>
    %109 = arith.select %108, %35, %105 : vector<1x8xi1>, vector<1x8xi32>
    %110 = vector.shape_cast %109 : vector<1x8xi32> to vector<1x1x8xi32>
    %c0_43 = arith.constant 0 : index
    %c0_44 = arith.constant 0 : index
    %c0_45 = arith.constant 0 : index
    %111 = vector.load %arg12[%c0_43, %c0_44, %c0_45] : memref<1x1x8xi32, #tpu.memory_space<vmem>>, vector<1x1x8xi32>
    tpu.vector_store %arg12[%c0_43, %c0_44, %c0_45], %110 {strides = array<i32>} : memref<1x1x8xi32, #tpu.memory_space<vmem>>, vector<1x1x8xi32>,
    return
  }
  func.func @transform_0(%arg0: i32) -> i32 {
    %c0_i32 = arith.constant 0 : i32
    %c0_i32_0 = arith.constant 0 : i32
    return %c0_i32 : i32
  }
  func.func @transform_1(%arg0: i32) -> i32 {
    %c0_i32 = arith.constant 0 : i32
    %c0_i32_0 = arith.constant 0 : i32
    return %c0_i32 : i32
  }
  func.func @transform_2(%arg0: i32) -> (i32, i32) {
    %c0_i32 = arith.constant 0 : i32
    %c0_i32_0 = arith.constant 0 : i32
    return %arg0, %c0_i32 : i32, i32
  }
  func.func @transform_3(%arg0: i32) -> (i32, i32) {
    %c0_i32 = arith.constant 0 : i32
    %c0_i32_0 = arith.constant 0 : i32
    %c0_i32_1 = arith.constant 0 : i32
    return %c0_i32, %c0_i32_0 : i32, i32
  }
  func.func @transform_4(%arg0: i32) -> (i32, i32) {
    %c0_i32 = arith.constant 0 : i32
    %c0_i32_0 = arith.constant 0 : i32
    %c0_i32_1 = arith.constant 0 : i32
    return %c0_i32, %c0_i32_0 : i32, i32
  }
  func.func @transform_5(%arg0: i32) -> (i32, i32) {
    %c0_i32 = arith.constant 0 : i32
    %c0_i32_0 = arith.constant 0 : i32
    %c0_i32_1 = arith.constant 0 : i32
    return %c0_i32, %c0_i32_0 : i32, i32
  }
  func.func @transform_6(%arg0: i32) -> (i32, i32) {
    %c0_i32 = arith.constant 0 : i32
    %c0_i32_0 = arith.constant 0 : i32
    %c0_i32_1 = arith.constant 0 : i32
    return %c0_i32, %c0_i32_0 : i32, i32
  }
  func.func @transform_7(%arg0: i32) -> (i32, i32) {
    %c0_i32 = arith.constant 0 : i32
    %c0_i32_0 = arith.constant 0 : i32
    %c0_i32_1 = arith.constant 0 : i32
    return %c0_i32, %c0_i32_0 : i32, i32
  }
  func.func @transform_8(%arg0: i32) -> (i32, i32) {
    %c0_i32 = arith.constant 0 : i32
    %c0_i32_0 = arith.constant 0 : i32
    %c0_i32_1 = arith.constant 0 : i32
    return %c0_i32, %c0_i32_0 : i32, i32
  }
  func.func @transform_9(%arg0: i32) -> (i32, i32) {
    %c0_i32 = arith.constant 0 : i32
    %c0_i32_0 = arith.constant 0 : i32
    return %arg0, %c0_i32 : i32, i32
  }
  func.func @transform_10(%arg0: i32) -> (i32, i32, i32) {
    %c0_i32 = arith.constant 0 : i32
    %c0_i32_0 = arith.constant 0 : i32
    %c0_i32_1 = arith.constant 0 : i32
    return %arg0, %c0_i32, %c0_i32_0 : i32, i32, i32
  }
  func.func @transform_11(%arg0: i32) -> (i32, i32, i32) {
    %c0_i32 = arith.constant 0 : i32
    %c0_i32_0 = arith.constant 0 : i32
    %c0_i32_1 = arith.constant 0 : i32
    return %arg0, %c0_i32, %c0_i32_0 : i32, i32, i32
  }
}

</mosaic_0001>

<llo_original>
// kernel: _ddqn_pallas.1
$region0: #{_ddqn_pallas.1}
  #allocation0 [shape = 'u32[]', space=smem, size = 0x4, offset = 0x4, fixed_abs, tag = 'smem constant byte address 0x4 - core index']
  #allocation1 [shape = 'u32[72,128]{1,0:T(1,128)}', space=vmem, size = 0x9000, scoped, tag = 'internal scratch']
  #allocation2 [shape = 's32[1]{0:T(128)S(6)}', space=smem, size = 0x200, scoped, tag = 'scoped memory for _ddqn_pallas.1']
  #allocation3 [shape = 'f32[1]{0:T(128)S(6)}', space=smem, size = 0x200, scoped, tag = 'scoped memory for _ddqn_pallas.1']
  %s0 = inlined_call_operand.<no memory space> [shape: s32[1], index: 0, kind: input, shape index: {}]
  %s1 = inlined_call_operand.<no memory space> [shape: f32[1], index: 1, kind: input, shape index: {}]
  %s2 = inlined_call_operand.vmem [shape: f32[8,32], index: 2, kind: input, shape index: {}]
  %s3 = inlined_call_operand.hbm [shape: bf16[32,32], index: 3, kind: input, shape index: {}]
  %s4 = inlined_call_operand.vmem [shape: f32[1,32], index: 4, kind: input, shape index: {}]
  %s5 = inlined_call_operand.hbm [shape: bf16[32,32], index: 5, kind: input, shape index: {}]
  %s6 = inlined_call_operand.vmem [shape: f32[1,32], index: 6, kind: input, shape index: {}]
  %s7 = inlined_call_operand.hbm [shape: bf16[32,128], index: 7, kind: input, shape index: {}]
  %s8 = inlined_call_operand.vmem [shape: f32[1,128], index: 8, kind: input, shape index: {}]
  %s9 = inlined_call_operand.vmem [shape: f32[8,128], index: 9, kind: output, shape index: {0}]
  %s10 = inlined_call_operand.vmem [shape: s32[1,1,8], index: 10, kind: output, shape index: {1}]
  %s11 = inlined_call_operand.vmem [shape: s32[1,1,8], index: 11, kind: output, shape index: {2}]
  %12 = xla_tuple %s9, %s10, %s11
  %s13 = sld [smem:[#allocation0]]
  $region74: #{_ddqn_pallas.1} parent=0
    _
  %s15 = ssub.s32 1, %s13
  %s16 = scalar_select 0, %s15, %s13
  %17 = sst [smem:[#allocation2]] %s0
  %18 = sst [smem:[#allocation3]] %s1
  $region1: #{_ddqn_pallas.1} parent=0
    #allocation4 [shape = 'u8[8192]{0}', space=vmem, size = 0x2000, scoped, tag = 'input window, operand 3, single buffered']
    #allocation5 [shape = 's32[1]{0}', space=sflag, size = 0x4, scoped, tag = 'scoped memory for _ddqn_pallas.1']
    #allocation6 [shape = 'u8[8192]{0}', space=vmem, size = 0x2000, scoped, tag = 'input window, operand 5, single buffered']
    #allocation7 [shape = 's32[1]{0}', space=sflag, size = 0x4, scoped, tag = 'scoped memory for _ddqn_pallas.1']
    #allocation8 [shape = 'u8[8192]{0}', space=vmem, size = 0x2000, scoped, tag = 'input window, operand 7, single buffered']
    %19 = vsyncpa [#allocation5], 0
    %20 = vsyncpa [#allocation7], 0
    // Predicated region
    $region2: #{_ddqn_pallas.1} parent=1 // pred_check
      _
    $region3: #{_ddqn_pallas.1} parent=1 // pred_check_branch
      %22 = sbr.rel (0) target = $region5
    $region4: #{_ddqn_pallas.1} parent=1 // pred_region
      _
    $region5: #{_ddqn_pallas.1} parent=1 // pred_fallthru
      _
    // Predicated region
    $region6: #{_ddqn_pallas.1} parent=1 // pred_check
      _
    $region7: #{_ddqn_pallas.1} parent=1 // pred_check_branch
      %24 = sbr.rel (0) target = $region9
    $region8: #{_ddqn_pallas.1} parent=1 // pred_region
      _
    $region9: #{_ddqn_pallas.1} parent=1 // pred_fallthru
      _
    // Predicated region
    $region10: #{_ddqn_pallas.1} parent=1 // pred_check
      _
    $region11: #{_ddqn_pallas.1} parent=1 // pred_check_branch
      %26 = sbr.rel (0) target = $region13
    $region12: #{_ddqn_pallas.1} parent=1 // pred_region
      _
    $region13: #{_ddqn_pallas.1} parent=1 // pred_fallthru
      _
    // Predicated region
    $region14: #{_ddqn_pallas.1} parent=1 // pred_check
      _
    $region15: #{_ddqn_pallas.1} parent=1 // pred_check_branch
      %28 = sbr.rel (0) target = $region17
    $region16: #{_ddqn_pallas.1} parent=1 // pred_region
      %30 = vsyncadd [#allocation5], 0
      %s31 = sshll.u32 %s3, 4
      %s32 = int_to_ptr.hbm [resolvable:$true] %s31
      %s33 = sshll.u32 [#allocation4], 4
      %s34 = int_to_ptr.vmem [resolvable:$true] %s33
      %39 = dma.hbm_to_vmem [thread:$0]  %s32, 256, %s34, [#allocation5], 64, 64, 4
    $region17: #{_ddqn_pallas.1} parent=1 // pred_fallthru
      _
    // Predicated region
    $region18: #{_ddqn_pallas.1} parent=1 // pred_check
      _
    $region19: #{_ddqn_pallas.1} parent=1 // pred_check_branch
      %41 = sbr.rel (0) target = $region21
    $region20: #{_ddqn_pallas.1} parent=1 // pred_region
      _
    $region21: #{_ddqn_pallas.1} parent=1 // pred_fallthru
      _
    // Predicated region
    $region22: #{_ddqn_pallas.1} parent=1 // pred_check
      _
    $region23: #{_ddqn_pallas.1} parent=1 // pred_check_branch
      %43 = sbr.rel (0) target = $region25
    $region24: #{_ddqn_pallas.1} parent=1 // pred_region
      %45 = vsyncadd [#allocation7], 0
      %s46 = sshll.u32 %s5, 4
      %s47 = int_to_ptr.hbm [resolvable:$true] %s46
      %s48 = sshll.u32 [#allocation6], 4
      %s49 = int_to_ptr.vmem [resolvable:$true] %s48
      %54 = dma.hbm_to_vmem [thread:$0]  %s47, 256, %s49, [#allocation7], 64, 64, 4
    $region25: #{_ddqn_pallas.1} parent=1 // pred_fallthru
      _
    // Predicated region
    $region26: #{_ddqn_pallas.1} parent=1 // pred_check
      _
    $region27: #{_ddqn_pallas.1} parent=1 // pred_check_branch
      %56 = sbr.rel (0) target = $region29
    $region28: #{_ddqn_pallas.1} parent=1 // pred_region
      _
    $region29: #{_ddqn_pallas.1} parent=1 // pred_fallthru
      _
    // Predicated region
    $region30: #{_ddqn_pallas.1} parent=1 // pred_check
      _
    $region31: #{_ddqn_pallas.1} parent=1 // pred_check_branch
      %58 = sbr.rel (0) target = $region33
    $region32: #{_ddqn_pallas.1} parent=1 // pred_region
      %60 = vsyncadd [#allocation7], 0
      %s61 = sshll.u32 %s7, 4
      %s62 = int_to_ptr.hbm [resolvable:$true] %s61
      %s63 = sshll.u32 [#allocation8], 4
      %s64 = int_to_ptr.vmem [resolvable:$true] %s63
      %69 = dma.hbm_to_vmem [thread:$0]  %s62, 256, %s64, [#allocation7], 64, 64, 4
    $region33: #{_ddqn_pallas.1} parent=1 // pred_fallthru
      _
    // Predicated region
    $region34: #{_ddqn_pallas.1} parent=1 // pred_check
      _
    $region35: #{_ddqn_pallas.1} parent=1 // pred_check_branch
      %71 = sbr.rel (0) target = $region37
    $region36: #{_ddqn_pallas.1} parent=1 // pred_region
      _
    $region37: #{_ddqn_pallas.1} parent=1 // pred_fallthru
      _
    // Predicated region
    $region38: #{_ddqn_pallas.1} parent=1 // pred_check
      _
    $region39: #{_ddqn_pallas.1} parent=1 // pred_check_branch
      %73 = sbr.rel (0) target = $region41
    $region40: #{_ddqn_pallas.1} parent=1 // pred_region
      %75 = dma.done [#allocation5], 256
    $region41: #{_ddqn_pallas.1} parent=1 // pred_fallthru
      _
    // Predicated region
    $region42: #{_ddqn_pallas.1} parent=1 // pred_check
      _
    $region43: #{_ddqn_pallas.1} parent=1 // pred_check_branch
      %77 = sbr.rel (0) target = $region45
    $region44: #{_ddqn_pallas.1} parent=1 // pred_region
      %79 = dma.done [#allocation7], 256
    $region45: #{_ddqn_pallas.1} parent=1 // pred_fallthru
      _
    // Predicated region
    $region46: #{_ddqn_pallas.1} parent=1 // pred_check
      _
    $region47: #{_ddqn_pallas.1} parent=1 // pred_check_branch
      %81 = sbr.rel (0) target = $region49
    $region48: #{_ddqn_pallas.1} parent=1 // pred_region
      %83 = dma.done [#allocation7], 256
    $region49: #{_ddqn_pallas.1} parent=1 // pred_fallthru
      _
    %v85 = vld [vmem:[%s2] sm:$0xff]
    %v86 = vpack.c.bf16 %v85, %v85
    %v87 = vld [vmem:[#allocation4] sm:$0xf]
    %v88 = vld [vmem:[#allocation4 + $0x4] sm:$0xf]
    %v89 = vld [vmem:[#allocation4 + $0x8] sm:$0xf]
    %v90 = vld [vmem:[#allocation4 + $0xc] sm:$0xf]
    %v91 = vld [vmem:[%s4] sm:$0x1]
    %v93 = vperm.slane %v91, 0
    %v99 = vunpack.c.l.b16 %v87
    %v100 = vunpack.c.l.b16 %v88
    %v101 = vunpack.c.l.b16 %v89
    %v102 = vunpack.c.l.b16 %v90
    %v103 = vpack.c.b16 %v100, %v99
    %v104 = vpack.c.b16 %v102, %v101
    %vm107 = vcmask 261120
    %v109 = vsel %vm107, %v86, 0
    %111 = vmatpush.bf16.msra.mxu0 0
    %112 = vmatpush.bf16.msra.mxu0 0
    %113 = vmatpush.bf16.msra.mxu0 0
    %114 = vmatpush.bf16.msra.mxu0 0
    %115 = vmatpush.bf16.msra.mxu0 0
    %116 = vmatpush.bf16.msra.mxu0 0
    %117 = vmatpush.bf16.msra.mxu0 %v104
    %118 = vmatpush.bf16.msra.mxu0 %v103
    %119 = vmatmul.bf16.gmra.mxu0 %v109
    %v120 = vpop.f32.mrf.mxu0
    %v121 = vadd.f32 %v93, %v120
    %v122 = vpop.f32.mrf.mxu0
    %123 = vdwg.mxu0
    %v124 = vmax.f32 %v121, 0.0
    %v125 = vpack.c.bf16 %v124, %v124
    %v126 = vld [vmem:[#allocation6] sm:$0xf]
    %v127 = vld [vmem:[#allocation6 + $0x4] sm:$0xf]
    %v128 = vld [vmem:[#allocation6 + $0x8] sm:$0xf]
    %v129 = vld [vmem:[#allocation6 + $0xc] sm:$0xf]
    %v130 = vld [vmem:[%s6] sm:$0x1]
    %v132 = vperm.slane %v130, 0
    %v138 = vunpack.c.l.b16 %v126
    %v139 = vunpack.c.l.b16 %v127
    %v140 = vunpack.c.l.b16 %v128
    %v141 = vunpack.c.l.b16 %v129
    %v142 = vpack.c.b16 %v139, %v138
    %v143 = vpack.c.b16 %v141, %v140
    %v147 = vsel %vm107, %v125, 0
    %149 = vmatpush.bf16.msra.mxu0 0
    %150 = vmatpush.bf16.msra.mxu0 0
    %151 = vmatpush.bf16.msra.mxu0 0
    %152 = vmatpush.bf16.msra.mxu0 0
    %153 = vmatpush.bf16.msra.mxu0 0
    %154 = vmatpush.bf16.msra.mxu0 0
    %155 = vmatpush.bf16.msra.mxu0 %v143
    %156 = vmatpush.bf16.msra.mxu0 %v142
    %157 = vmatmul.bf16.gmra.mxu0 %v147
    %v158 = vpop.f32.mrf.mxu0
    %v159 = vadd.f32 %v132, %v158
    %v160 = vpop.f32.mrf.mxu0
    %161 = vdwg.mxu0
    %v162 = vmax.f32 %v159, 0.0
    %v163 = vpack.c.bf16 %v162, %v162
    %v164 = vld [vmem:[#allocation8] sm:$0xf]
    %v165 = vld [vmem:[#allocation8 + $0x4] sm:$0xf]
    %v166 = vld [vmem:[#allocation8 + $0x8] sm:$0xf]
    %v167 = vld [vmem:[#allocation8 + $0xc] sm:$0xf]
    %v168 = vld [vmem:[%s8] sm:$0x1]
    %v170 = vperm.slane %v168, 0
    %v176 = vunpack.c.l.b16 %v164
    %v177 = vunpack.c.l.b16 %v165
    %v178 = vunpack.c.l.b16 %v166
    %v179 = vunpack.c.l.b16 %v167
    %v180 = vpack.c.b16 %v177, %v176
    %v181 = vpack.c.b16 %v179, %v178
    %v185 = vsel %vm107, %v163, 0
    %187 = vmatpush.bf16.msra.mxu0 0
    %188 = vmatpush.bf16.msra.mxu0 0
    %189 = vmatpush.bf16.msra.mxu0 0
    %190 = vmatpush.bf16.msra.mxu0 0
    %191 = vmatpush.bf16.msra.mxu0 0
    %192 = vmatpush.bf16.msra.mxu0 0
    %193 = vmatpush.bf16.msra.mxu0 %v181
    %194 = vmatpush.bf16.msra.mxu0 %v180
    %195 = vmatmul.bf16.gmra.mxu0 %v185
    %v196 = vpop.f32.mrf.mxu0
    %v197 = vadd.f32 %v170, %v196
    %v198 = vpop.f32.mrf.mxu0
    %199 = vdwg.mxu0
    %200 = vst [vmem:[%s9] sm:$0xff] %v197
    %201 = vxpose.xlu0.b32.start [1/16] %v197, 128
    %202 = vxpose.xlu0.b32.cont [2/16] 0.0, 128
    %203 = vxpose.xlu0.b32.cont [3/16] 0.0, 128
    %204 = vxpose.xlu0.b32.cont [4/16] 0.0, 128
    %205 = vxpose.xlu0.b32.cont [5/16] 0.0, 128
    %206 = vxpose.xlu0.b32.cont [6/16] 0.0, 128
    %207 = vxpose.xlu0.b32.cont [7/16] 0.0, 128
    %208 = vxpose.xlu0.b32.cont [8/16] 0.0, 128
    %209 = vxpose.xlu0.b32.cont [9/16] 0.0, 128
    %210 = vxpose.xlu0.b32.cont [10/16] 0.0, 128
    %211 = vxpose.xlu0.b32.cont [11/16] 0.0, 128
    %212 = vxpose.xlu0.b32.cont [12/16] 0.0, 128
    %213 = vxpose.xlu0.b32.cont [13/16] 0.0, 128
    %214 = vxpose.xlu0.b32.cont [14/16] 0.0, 128
    %215 = vxpose.xlu0.b32.cont [15/16] 0.0, 128
    %216 = vxpose.xlu0.b32.end [16/16] 0.0, 128
    %v217 = vpop.trf.xlu0
    %v218 = vpop.trf.xlu0
    %v219 = vpop.trf.xlu0
    %v220 = vpop.trf.xlu0
    %v221 = vpop.trf.xlu0
    %v222 = vpop.trf.xlu0
    %v223 = vpop.trf.xlu0
    %v224 = vpop.trf.xlu0
    %v225 = vpop.trf.xlu0
    %v226 = vpop.trf.xlu0
    %v227 = vpop.trf.xlu0
    %v228 = vpop.trf.xlu0
    %v229 = vpop.trf.xlu0
    %v230 = vpop.trf.xlu0
    %v231 = vpop.trf.xlu0
    %v232 = vpop.trf.xlu0
    %vm233 = vcmask 64512
    %v234 = vsel %vm233, %v217, -inf
    %v235 = vsel %vm233, %v218, -inf
    %v236 = vsel %vm233, %v219, -inf
    %v237 = vsel %vm233, %v220, -inf
    %v238 = vsel %vm233, %v221, -inf
    %v239 = vmax.f32 %v234, %v238
    %v240 = vsel %vm233, %v222, -inf
    %v241 = vmax.f32 %v235, %v240
    %v242 = vsel %vm233, %v223, -inf
    %v243 = vmax.f32 %v236, %v242
    %v244 = vsel %vm233, %v224, -inf
    %v245 = vmax.f32 %v237, %v244
    %v246 = vsel %vm233, %v225, -inf
    %v247 = vmax.f32 %v239, %v246
    %v248 = vsel %vm233, %v226, -inf
    %v249 = vmax.f32 %v241, %v248
    %v250 = vsel %vm233, %v227, -inf
    %v251 = vmax.f32 %v243, %v250
    %v252 = vsel %vm233, %v228, -inf
    %v253 = vmax.f32 %v245, %v252
    %v254 = vsel %vm233, %v229, -inf
    %v255 = vmax.f32 %v247, %v254
    %v256 = vsel %vm233, %v230, -inf
    %v257 = vmax.f32 %v249, %v256
    %v258 = vsel %vm233, %v231, -inf
    %v259 = vmax.f32 %v251, %v258
    %v260 = vsel %vm233, %v232, -inf
    %v261 = vmax.f32 %v253, %v260
    %v262 = vmax.f32 %v255, %v257
    %v263 = vmax.f32 %v259, %v261
    %v264 = vmax.f32 %v262, %v263
    %v265 = vrot.slane %v264, 4
    %v266 = vmax.f32 %v264, %v265
    %v267 = vrot.slane %v266, 2
    %v268 = vmax.f32 %v266, %v267
    %v269 = vrot.slane %v268, 1
    %v270 = vmax.f32 %v268, %v269
    %v271 = vlaneseq
    %v272 = vshrl.u32 %v271, 7
    %v273 = vadd.s32 %v272, 8
    %v274 = vadd.s32 %v272, 16
    %v275 = vadd.s32 %v272, 24
    %v276 = vadd.s32 %v272, 32
    %v277 = vadd.s32 %v272, 40
    %v278 = vadd.s32 %v272, 48
    %v279 = vadd.s32 %v272, 56
    %v280 = vadd.s32 %v272, 64
    %v281 = vadd.s32 %v272, 72
    %v282 = vadd.s32 %v272, 80
    %v283 = vadd.s32 %v272, 88
    %v284 = vadd.s32 %v272, 96
    %v285 = vadd.s32 %v272, 104
    %v286 = vadd.s32 %v272, 112
    %v287 = vadd.s32 %v272, 120
    %vm288 = vcmp.eq.f32.partialorder %v217, %v270
    %vm289 = vcmp.eq.f32.partialorder %v218, %v270
    %vm290 = vcmp.eq.f32.partialorder %v219, %v270
    %vm291 = vcmp.eq.f32.partialorder %v220, %v270
    %vm292 = vcmp.eq.f32.partialorder %v221, %v270
    %vm293 = vcmp.eq.f32.partialorder %v222, %v270
    %vm294 = vcmp.eq.f32.partialorder %v223, %v270
    %vm295 = vcmp.eq.f32.partialorder %v224, %v270
    %vm296 = vcmp.eq.f32.partialorder %v225, %v270
    %vm297 = vcmp.eq.f32.partialorder %v226, %v270
    %vm298 = vcmp.eq.f32.partialorder %v227, %v270
    %vm299 = vcmp.eq.f32.partialorder %v228, %v270
    %vm300 = vcmp.eq.f32.partialorder %v229, %v270
    %vm301 = vcmp.eq.f32.partialorder %v230, %v270
    %vm302 = vcmp.eq.f32.partialorder %v231, %v270
    %vm303 = vcmp.eq.f32.partialorder %v232, %v270
    %v304 = vsel %vm288, %v272, 128
    %v305 = vsel %vm289, %v273, 128
    %v306 = vsel %vm290, %v274, 128
    %v307 = vsel %vm291, %v275, 128
    %v308 = vsel %vm292, %v276, 128
    %v309 = vsel %vm293, %v277, 128
    %v310 = vsel %vm294, %v278, 128
    %v311 = vsel %vm295, %v279, 128
    %v312 = vsel %vm296, %v280, 128
    %v313 = vsel %vm297, %v281, 128
    %v314 = vsel %vm298, %v282, 128
    %v315 = vsel %vm299, %v283, 128
    %v316 = vsel %vm300, %v284, 128
    %v317 = vsel %vm301, %v285, 128
    %v318 = vsel %vm302, %v286, 128
    %v319 = vsel %vm303, %v287, 128
    %v320 = vsel %vm233, %v304, 2147483647
    %v321 = vsel %vm233, %v305, 2147483647
    %v322 = vsel %vm233, %v306, 2147483647
    %v323 = vsel %vm233, %v307, 2147483647
    %v324 = vsel %vm233, %v308, 2147483647
    %vm325 = vcmp.lt.s32.totalorder %v320, %v324
    %v326 = vsel %vm325, %v320, %v324
    %v327 = vsel %vm233, %v309, 2147483647
    %vm328 = vcmp.lt.s32.totalorder %v321, %v327
    %v329 = vsel %vm328, %v321, %v327
    %v330 = vsel %vm233, %v310, 2147483647
    %vm331 = vcmp.lt.s32.totalorder %v322, %v330
    %v332 = vsel %vm331, %v322, %v330
    %v333 = vsel %vm233, %v311, 2147483647
    %vm334 = vcmp.lt.s32.totalorder %v323, %v333
    %v335 = vsel %vm334, %v323, %v333
    %v336 = vsel %vm233, %v312, 2147483647
    %vm337 = vcmp.lt.s32.totalorder %v326, %v336
    %v338 = vsel %vm337, %v326, %v336
    %v339 = vsel %vm233, %v313, 2147483647
    %vm340 = vcmp.lt.s32.totalorder %v329, %v339
    %v341 = vsel %vm340, %v329, %v339
    %v342 = vsel %vm233, %v314, 2147483647
    %vm343 = vcmp.lt.s32.totalorder %v332, %v342
    %v344 = vsel %vm343, %v332, %v342
    %v345 = vsel %vm233, %v315, 2147483647
    %vm346 = vcmp.lt.s32.totalorder %v335, %v345
    %v347 = vsel %vm346, %v335, %v345
    %v348 = vsel %vm233, %v316, 2147483647
    %vm349 = vcmp.lt.s32.totalorder %v338, %v348
    %v350 = vsel %vm349, %v338, %v348
    %v351 = vsel %vm233, %v317, 2147483647
    %vm352 = vcmp.lt.s32.totalorder %v341, %v351
    %v353 = vsel %vm352, %v341, %v351
    %v354 = vsel %vm233, %v318, 2147483647
    %vm355 = vcmp.lt.s32.totalorder %v344, %v354
    %v356 = vsel %vm355, %v344, %v354
    %v357 = vsel %vm233, %v319, 2147483647
    %vm358 = vcmp.lt.s32.totalorder %v347, %v357
    %v359 = vsel %vm358, %v347, %v357
    %vm360 = vcmp.lt.s32.totalorder %v350, %v353
    %v361 = vsel %vm360, %v350, %v353
    %vm362 = vcmp.lt.s32.totalorder %v356, %v359
    %v363 = vsel %vm362, %v356, %v359
    %vm364 = vcmp.lt.s32.totalorder %v361, %v363
    %v365 = vsel %vm364, %v361, %v363
    %v366 = vrot.slane %v365, 4
    %vm367 = vcmp.lt.s32.totalorder %v365, %v366
    %v368 = vsel %vm367, %v365, %v366
    %v369 = vrot.slane %v368, 2
    %vm370 = vcmp.lt.s32.totalorder %v368, %v369
    %v371 = vsel %vm370, %v368, %v369
    %v372 = vrot.slane %v371, 1
    %vm373 = vcmp.lt.s32.totalorder %v371, %v372
    %v374 = vsel %vm373, %v371, %v372
    %vm375 = vcmp.lt.s32.totalorder %v374, 7
    %v376 = vsel %vm375, %v374, 7
    %vm377 = vcmask 57344
    %378 = vst.msk [vmem:[%s10] sm:$0x1] %vm377, %v376
    %s379 = smul.u32 0, 8
    %v380 = vlaneseq
    %v381 = vand.u32 %v380, 127
    %v382 = vstv %s379
    %v383 = vadd.s32 %v382, %v381
    %v384 = vmul.u32 %v383, 2654435761
    %s385 = sld [smem:[#allocation2]]
    %v386 = vstv %s385
    %v387 = vadd.s32 %v384, %v386
    %v388 = vshra.s32 %v387, 16
    %v389 = vand.u32 %v388, 65535
    %v390 = vxor.u32 %v387, %v389
    %v391 = vmul.u32 %v390, 2146121005
    %v392 = vshra.s32 %v391, 15
    %v393 = vand.u32 %v392, 131071
    %v394 = vxor.u32 %v391, %v393
    %v395 = vmul.u32 %v394, 2221898379
    %v396 = vshra.s32 %v395, 16
    %v397 = vand.u32 %v396, 65535
    %v398 = vxor.u32 %v395, %v397
    %v399 = vshra.s32 %v398, 8
    %v400 = vand.u32 %v399, 16777215
    %v401 = vcvt.s32.f32 %v400
    %v402 = vmul.f32 %v401, 5.9604645e-08
    %v403 = vxor.u32 %v398, 1663821227
    %v404 = vshra.s32 %v403, 16
    %v405 = vand.u32 %v404, 65535
    %v406 = vxor.u32 %v403, %v405
    %v407 = vmul.u32 %v406, 2146121005
    %v408 = vshra.s32 %v407, 15
    %v409 = vand.u32 %v408, 131071
    %v410 = vxor.u32 %v407, %v409
    %v411 = vmul.u32 %v410, 2221898379
    %v412 = vshra.s32 %v411, 16
    %v413 = vand.u32 %v412, 65535
    %v414 = vxor.u32 %v411, %v413
    %v415 = vshra.s32 %v414, 8
    %v416 = vand.u32 %v415, 16777215
    %v417 = vcvt.s32.f32 %v416
    %v418 = vmul.f32 %v417, 5.9604645e-08
    %v419 = vmul.f32 %v418, 8.0
    %v420 = vcvt.f32.s32.to.zero.pseudo %v419
    %vm421 = vcmp.lt.s32.totalorder %v420, 7
    %v422 = vsel %vm421, %v420, 7
    %s423 = sld [smem:[#allocation3]]
    %v424 = vstv %s423
    %vm425 = vcmp.le.f32.partialorder %v402, %v424
    %v426 = vsel %vm425, %v376, %v422
    %427 = vst.msk [vmem:[%s11] sm:$0x1] %vm377, %v426
    // Predicated region
    $region50: #{_ddqn_pallas.1} parent=1 // pred_check
      _
    $region51: #{_ddqn_pallas.1} parent=1 // pred_check_branch
      %429 = sbr.rel (0) target = $region53
    $region52: #{_ddqn_pallas.1} parent=1 // pred_region
      _
    $region53: #{_ddqn_pallas.1} parent=1 // pred_fallthru
      _
    // Predicated region
    $region54: #{_ddqn_pallas.1} parent=1 // pred_check
      _
    $region55: #{_ddqn_pallas.1} parent=1 // pred_check_branch
      %431 = sbr.rel (0) target = $region57
    $region56: #{_ddqn_pallas.1} parent=1 // pred_region
      _
    $region57: #{_ddqn_pallas.1} parent=1 // pred_fallthru
      _
    // Predicated region
    $region58: #{_ddqn_pallas.1} parent=1 // pred_check
      _
    $region59: #{_ddqn_pallas.1} parent=1 // pred_check_branch
      %433 = sbr.rel (0) target = $region61
    $region60: #{_ddqn_pallas.1} parent=1 // pred_region
      _
    $region61: #{_ddqn_pallas.1} parent=1 // pred_fallthru
      _
    // Predicated region
    $region62: #{_ddqn_pallas.1} parent=1 // pred_check
      _
    $region63: #{_ddqn_pallas.1} parent=1 // pred_check_branch
      %435 = sbr.rel (0) target = $region65
    $region64: #{_ddqn_pallas.1} parent=1 // pred_region
      _
    $region65: #{_ddqn_pallas.1} parent=1 // pred_fallthru
      _
    // Predicated region
    $region66: #{_ddqn_pallas.1} parent=1 // pred_check
      _
    $region67: #{_ddqn_pallas.1} parent=1 // pred_check_branch
      %437 = sbr.rel (0) target = $region69
    $region68: #{_ddqn_pallas.1} parent=1 // pred_region
      _
    $region69: #{_ddqn_pallas.1} parent=1 // pred_fallthru
      _
    // Predicated region
    $region70: #{_ddqn_pallas.1} parent=1 // pred_check
      _
    $region71: #{_ddqn_pallas.1} parent=1 // pred_check_branch
      %439 = sbr.rel (0) target = $region73
    $region72: #{_ddqn_pallas.1} parent=1 // pred_region
      _
    $region73: #{_ddqn_pallas.1} parent=1 // pred_fallthru
      _
    %440 = vsyncpa [#allocation5], 1
    %441 = vsyncpa [#allocation7], 1

</llo_original>
